<compile_context>
chip_gen: v7x
topology: tpu7x:2x2x1
jax: 0.10.0
libtpu: 0.0.40
codegen_flags: <defaults>
</compile_context>

<pallas_src>
import functools

import numpy as np

import jax
import jax.numpy as jnp
from jax.experimental import pallas as pl
from jax.experimental.pallas import tpu as pltpu


# ---------------------------------------------------------------------------
# Host-side (numpy) construction of the bilinear resampling weights.
# ---------------------------------------------------------------------------

def _interp_matrix_np(out_size: int, in_size: int) -> np.ndarray:
    """Bilinear resampling matrix for grid_sample with an identity affine grid
    (align_corners=False, padding_mode='zeros'). Out-of-bounds taps get 0."""
    i = np.arange(out_size, dtype=np.float64)
    src = (i + 0.5) * (float(in_size) / float(out_size)) - 0.5
    lo = np.floor(src)
    w_hi = (src - lo).astype(np.float32)
    w_lo = (1.0 - w_hi).astype(np.float32)
    lo_i = lo.astype(np.int64)[:, None]                  # (out, 1)
    cols = np.arange(in_size, dtype=np.int64)[None, :]   # (1, in)
    m = (np.where(cols == lo_i, w_lo[:, None], 0.0)
         + np.where(cols == lo_i + 1, w_hi[:, None], 0.0))
    return m.astype(np.float32)


@functools.lru_cache(maxsize=64)
def _fused_weight(h_in, w_in, h_out, w_out, m_pad, dtype):
    """(Hi*Wi, m_pad) fused + pre-transposed + zero-column-padded weight,
    built once per geometry on the host and cached (constant under jit)."""
    wy = _interp_matrix_np(h_out, h_in)                  # (Ho, Hi)
    wx = _interp_matrix_np(w_out, w_in)                  # (Wo, Wi)
    k = h_in * w_in
    m = h_out * w_out
    # w_big[h*Wi + w, ho*Wo + wo] = wy[ho, h] * wx[wo, w]
    w_big = np.einsum("oh,pw->hwop", wy, wx).reshape(k, m)
    if m_pad != m:
        w_big = np.pad(w_big, ((0, 0), (0, m_pad - m)))
    return jnp.asarray(w_big, dtype=dtype)


def _vmem_capacity_bytes() -> int:
    cap = 64 * 1024 * 1024  # conservative default = v7x per-TensorCore VMEM
    try:
        info = pltpu.get_tpu_info()
        cap = int(getattr(info, "vmem_capacity_bytes", cap))
    except Exception:
        pass
    return cap


# ---------------------------------------------------------------------------
# Kernel
# ---------------------------------------------------------------------------

def _transform_kernel(x_ref, w_ref, o_ref, *, variance: bool, compute_dtype):
    # x_ref: (BC, Hi*Wi)   w_ref: (Hi*Wi, M_pad)   o_ref: (BC, M_pad)
    x = x_ref[...]
    if variance:
        # exp issues on the EUP slot; compute in f32, return to the MXU dtype.
        x = jnp.exp(x.astype(jnp.float32) * 0.5).astype(compute_dtype)
    else:
        x = x.astype(compute_dtype)
    out = jnp.dot(x, w_ref[...], preferred_element_type=jnp.float32)
    if variance:
        # Guard: zero-padded weight columns produce exact zeros (sliced off later).
        out = jnp.log(jnp.maximum(out, 1e-30)) * 2.0
    o_ref[...] = out.astype(o_ref.dtype)


# ---------------------------------------------------------------------------
# Wrapper
# ---------------------------------------------------------------------------

def _pick_block_planes(nc, k, m_pad, x_itemsize, w_itemsize, vmem_cap, two_cores):
    """Plane-batch per grid step: multiple of the dtype's sublane pack, sized
    against the real VMEM capacity; >=2 grid steps only when 2 TCs exist."""
    pack = max(8, 32 // int(x_itemsize))            # f32:8, bf16:16, int8/fp8:32

    def round_up(v, mult):
        return ((int(v) + mult - 1) // mult) * mult

    budget = int(vmem_cap) * 3 // 4                 # leave compiler headroom
    weight_bytes = 2 * w_itemsize * k * m_pad       # conservatively 2 weight bufs
    per_plane = 2 * x_itemsize * (k + m_pad)        # double-buffered in + out rows
    avail = budget - weight_bytes
    cap = pack if avail <= 0 else max(pack, (avail // per_plane) // pack * pack)

    target = nc
    if two_cores and nc > pack:
        target = -(-nc // 2)                        # ~half the planes per step
    return int(max(pack, min(cap, 1024, round_up(target, pack), round_up(nc, pack))))


def transform(x: jnp.ndarray, hw, variance: bool = False,
              block_planes: int | None = None) -> jnp.ndarray:
    """Pallas implementation of Transform.forward (NCHW in, NCHW out)."""
    n, c, h_in, w_in = x.shape
    h_out, w_out = int(hw[0]), int(hw[1])
    nc = n * c
    k = h_in * w_in
    m = h_out * w_out
    m_pad = ((m + 127) // 128) * 128                # lane-dense output columns

    # Native bf16 MXU path for bf16 inputs; f32 otherwise.
    compute_dtype = jnp.bfloat16 if x.dtype == jnp.bfloat16 else jnp.float32
    w_big = _fused_weight(h_in, w_in, h_out, w_out, m_pad, compute_dtype)
    x_itemsize = int(np.dtype(x.dtype).itemsize)
    w_itemsize = int(np.dtype(compute_dtype).itemsize)

    vmem_cap = _vmem_capacity_bytes()
    two_cores = vmem_cap <= 64 * 1024 * 1024        # v7x proxy: 64 MiB/TC, 2 TCs

    bc = block_planes if block_planes is not None else _pick_block_planes(
        nc, k, m_pad, x_itemsize, w_itemsize, vmem_cap, two_cores)
    grid = pl.cdiv(nc, bc)
    nc_pad = grid * bc

    # Trivial reshape only; input stays in its original dtype in HBM.
    x_flat = x.reshape(nc, k)
    if nc_pad != nc:
        x_flat = jnp.pad(x_flat, ((0, nc_pad - nc), (0, 0)))

    need = (2 * w_itemsize * k * m_pad
            + 2 * x_itemsize * bc * (k + m_pad)
            + (4 << 20))
    vmem_limit = int(min(max(need, 32 << 20), max(vmem_cap - (8 << 20), need)))

    kernel = functools.partial(_transform_kernel, variance=variance,
                               compute_dtype=compute_dtype)

    cost = pl.CostEstimate(
        flops=2 * nc_pad * k * m_pad,
        transcendentals=(nc_pad * (k + m_pad)) if variance else 0,
        bytes_accessed=(nc_pad * k * x_itemsize
                        + k * m_pad * w_itemsize
                        + nc_pad * m_pad * x_itemsize),
    )

    out_flat = pl.pallas_call(
        kernel,
        out_shape=jax.ShapeDtypeStruct((nc_pad, m_pad), x.dtype),
        grid_spec=pltpu.PrefetchScalarGridSpec(
            num_scalar_prefetch=0,
            grid=(grid,),
            in_specs=[
                pl.BlockSpec((bc, k), lambda i: (i, 0)),      # plane batch
                pl.BlockSpec((k, m_pad), lambda i: (0, 0)),   # resident fused weight
            ],
            out_specs=pl.BlockSpec((bc, m_pad), lambda i: (i, 0)),
        ),
        compiler_params=pltpu.CompilerParams(
            dimension_semantics=("parallel",),
            vmem_limit_bytes=vmem_limit,
        ),
        cost_estimate=cost,
    )(x_flat, w_big)

    return out_flat[:nc, :m].reshape(n, c, h_out, w_out)


# ---------------------------------------------------------------------------
# Pure-JAX reference with identical sampling semantics.
# ---------------------------------------------------------------------------

def _reference(x, hw, variance=False):
    n, c, h_in, w_in = x.shape
    h_out, w_out = int(hw[0]), int(hw[1])
    wy = jnp.asarray(_interp_matrix_np(h_out, h_in))
    wx = jnp.asarray(_interp_matrix_np(w_out, w_in))
    xi = x.astype(jnp.float32)
    if variance:
        xi = jnp.exp(xi * 0.5)
    out = jnp.einsum("oi,ncij,pj->ncop", wy, xi, wx)
    if variance:
        out = jnp.log(out) * 2.0
    return out.astype(x.dtype)


if __name__ == "__main__":
    key = jax.random.PRNGKey(0)
    n, c, h, w = 2, 4, 16, 16
    hw = (24, 24)
    x = jax.random.normal(key, (n, c, h, w), dtype=jnp.float32)

    # Mean path. Tolerances cover the MXU's default reduced-pass f32 precision.
    out = transform(x, hw, variance=False)
    jax.block_until_ready(out)
    ref = _reference(x, hw, variance=False)
    assert out.shape == (n, c, hw[0], hw[1])
    assert jnp.allclose(out, ref, atol=1e-2, rtol=1e-2), \
        float(jnp.max(jnp.abs(out - ref)))

    # Variance path (exp before sampling, log*2 after).
    out_v = transform(x, hw, variance=True)
    jax.block_until_ready(out_v)
    ref_v = _reference(x, hw, variance=True)
    assert jnp.allclose(out_v, ref_v, atol=1e-2, rtol=1e-2), \
        float(jnp.max(jnp.abs(out_v - ref_v)))

    # bf16 input exercises the native bf16 MXU path (bf16 weight, f32 accumulate).
    xb = x.astype(jnp.bfloat16)
    out_b = transform(xb, hw, variance=False)
    jax.block_until_ready(out_b)
    assert out_b.shape == (n, c, hw[0], hw[1]) and out_b.dtype == jnp.bfloat16
    assert bool(jnp.all(jnp.isfinite(out_b.astype(jnp.float32))))

    print("KERNEL_OK")
</pallas_src>

<mosaic_0001>
module attributes {stable_mosaic.version = 11 : i64} {
  func.func @_transform_kernel(%arg0: i32, %arg1: memref<8x256xf32, #tpu.memory_space<vmem>>, %arg2: memref<256x640xf32, #tpu.memory_space<vmem>>, %arg3: memref<8x640xf32, #tpu.memory_space<vmem>>) attributes {dimension_semantics = [#tpu.dimension_semantics<parallel>], iteration_bounds = array<i64: 1>, scalar_prefetch = 0 : i64, scratch_operands = 0 : i64, tpu.core_type = #tpu.core_type<tc>, window_params = [{transform_indices = @transform_0, window_bounds = array<i64: 8, 256>}, {pipeline_mode = #tpu.pipeline_mode<synchronous>, transform_indices = @transform_1, window_bounds = array<i64: 256, 640>}, {transform_indices = @transform_2, window_bounds = array<i64: 8, 640>}]} {
    %c0 = arith.constant 0 : index
    %c0_0 = arith.constant 0 : index
    %0 = vector.load %arg1[%c0, %c0_0] : memref<8x256xf32, #tpu.memory_space<vmem>>, vector<8x256xf32>
    %c0_1 = arith.constant 0 : index
    %c0_2 = arith.constant 0 : index
    %1 = vector.load %arg2[%c0_1, %c0_2] : memref<256x640xf32, #tpu.memory_space<vmem>>, vector<256x640xf32>
    %cst = arith.constant dense<0.000000e+00> : vector<8x640xf32>
    %2 = tpu.matmul %0, %1, %cst {dimension_numbers = #tpu.dot_dimension_numbers<[1], [0], [0], [1], [0, 0, 1, 1], [], []>} : vector<8x256xf32>, vector<256x640xf32>, vector<8x640xf32> -> vector<8x640xf32>
    %c0_3 = arith.constant 0 : index
    %c0_4 = arith.constant 0 : index
    %3 = vector.load %arg3[%c0_3, %c0_4] : memref<8x640xf32, #tpu.memory_space<vmem>>, vector<8x640xf32>
    tpu.vector_store %arg3[%c0_3, %c0_4], %2 {strides = array<i32>} : memref<8x640xf32, #tpu.memory_space<vmem>>, vector<8x640xf32>,
    return
  }
  func.func @transform_0(%arg0: i32) -> (i32, i32) {
    %c0_i32 = arith.constant 0 : i32
    %c0_i32_0 = arith.constant 0 : i32
    return %arg0, %c0_i32 : i32, i32
  }
  func.func @transform_1(%arg0: i32) -> (i32, i32) {
    %c0_i32 = arith.constant 0 : i32
    %c0_i32_0 = arith.constant 0 : i32
    %c0_i32_1 = arith.constant 0 : i32
    return %c0_i32, %c0_i32_0 : i32, i32
  }
  func.func @transform_2(%arg0: i32) -> (i32, i32) {
    %c0_i32 = arith.constant 0 : i32
    %c0_i32_0 = arith.constant 0 : i32
    return %arg0, %c0_i32 : i32, i32
  }
}

</mosaic_0001>

<llo_original>
// kernel: tpu_custom_call.1
$region0: #{tpu_custom_call.1}
  #allocation0 [shape = 'u32[]', space=smem, size = 0x4, offset = 0x4, fixed_abs, tag = 'smem constant byte address 0x4 - core index']
  #allocation1 [shape = 'u32[144,128]{1,0:T(1,128)}', space=vmem, size = 0x12000, scoped, tag = 'internal scratch']
  %s0 = inlined_call_operand.hbm [shape: f32[8,256], index: 0, kind: input, shape index: {}]
  %s1 = inlined_call_operand.hbm [shape: f32[256,640], index: 1, kind: input, shape index: {}]
  %s2 = inlined_call_operand.hbm [shape: f32[8,640], index: 2, kind: output, shape index: {}]
  %s3 = sld [smem:[#allocation0]]
  $region26: #{tpu_custom_call.1} parent=0
    _
  %s5 = ssub.s32 1, %s3
  %s6 = scalar_select 0, %s5, %s3
  $region1: #{tpu_custom_call.1} parent=0
    #allocation2 [shape = 'u8[8192]{0}', space=vmem, size = 0x2000, scoped, tag = 'input window, operand 0, single buffered']
    #allocation3 [shape = 's32[1]{0}', space=sflag, size = 0x4, scoped, tag = 'scoped memory for tpu_custom_call.1']
    #allocation4 [shape = 's32[1]{0}', space=sflag, size = 0x4, scoped, tag = 'scoped memory for tpu_custom_call.1']
    #allocation5 [shape = 'u8[655360]{0}', space=vmem, size = 0xa0000, scoped, tag = 'input window, operand 1, single buffered']
    #allocation6 [shape = 's32[1]{0}', space=sflag, size = 0x4, scoped, tag = 'scoped memory for tpu_custom_call.1']
    #allocation7 [shape = 'u8[20480]{0}', space=vmem, size = 0x5000, scoped, tag = 'output window, operand 0, single buffered']
    %7 = vsyncpa [#allocation3], 0
    %8 = vsyncpa [#allocation6], 0
    %9 = vsyncpa [#allocation4], 0
    // Predicated region
    $region2: #{tpu_custom_call.1} parent=1 // pred_check
      _
    $region3: #{tpu_custom_call.1} parent=1 // pred_check_branch
      %11 = sbr.rel (0) target = $region5
    $region4: #{tpu_custom_call.1} parent=1 // pred_region
      %s13 = ssub.s32 256, 256
      %14 = vsyncadd [#allocation3], %s13
      %s16 = sshll.u32 [#allocation2], 4
      %s17 = int_to_ptr.vmem [resolvable:$true] %s16
      %19 = dma.hbm_to_vmem [thread:$0]  %s0, 256, %s17, [#allocation3]
    $region5: #{tpu_custom_call.1} parent=1 // pred_fallthru
      _
    // Predicated region
    $region6: #{tpu_custom_call.1} parent=1 // pred_check
      _
    $region7: #{tpu_custom_call.1} parent=1 // pred_check_branch
      %21 = sbr.rel (0) target = $region9
    $region8: #{tpu_custom_call.1} parent=1 // pred_region
      %s23 = ssub.s32 20480, 20480
      %24 = vsyncadd [#allocation6], %s23
      %s25 = sshll.u32 [#allocation5], 4
      %s26 = int_to_ptr.vmem [resolvable:$true] %s25
      %31 = dma.hbm_to_vmem [thread:$0]  %s1, 20480, %s26, [#allocation6], 640, 640, 40
    $region9: #{tpu_custom_call.1} parent=1 // pred_fallthru
      _
    // Predicated region
    $region10: #{tpu_custom_call.1} parent=1 // pred_check
      _
    $region11: #{tpu_custom_call.1} parent=1 // pred_check_branch
      %33 = sbr.rel (0) target = $region13
    $region12: #{tpu_custom_call.1} parent=1 // pred_region
      %34 = dma.done [#allocation3], 256
    $region13: #{tpu_custom_call.1} parent=1 // pred_fallthru
      _
    // Predicated region
    $region14: #{tpu_custom_call.1} parent=1 // pred_check
      _
    $region15: #{tpu_custom_call.1} parent=1 // pred_check_branch
      %36 = sbr.rel (0) target = $region17
    $region16: #{tpu_custom_call.1} parent=1 // pred_region
      %37 = dma.done [#allocation6], 20480
    $region17: #{tpu_custom_call.1} parent=1 // pred_fallthru
      _
    %v38 = vld [vmem:[#allocation2] sm:$0xff]
    %v39 = vld [vmem:[#allocation2 + $0x8] sm:$0xff]
    %v40 = vld [vmem:[#allocation5] sm:$0xff]
    %v41 = vld [vmem:[#allocation5 + $0x8] sm:$0xff]
    %v42 = vld [vmem:[#allocation5 + $0x10] sm:$0xff]
    %v43 = vld [vmem:[#allocation5 + $0x18] sm:$0xff]
    %v44 = vld [vmem:[#allocation5 + $0x20] sm:$0xff]
    %v45 = vld [vmem:[#allocation5 + $0x28] sm:$0xff]
    %v46 = vld [vmem:[#allocation5 + $0x30] sm:$0xff]
    %v47 = vld [vmem:[#allocation5 + $0x38] sm:$0xff]
    %v48 = vld [vmem:[#allocation5 + $0x40] sm:$0xff]
    %v49 = vld [vmem:[#allocation5 + $0x48] sm:$0xff]
    %v50 = vld [vmem:[#allocation5 + $0x50] sm:$0xff]
    %v51 = vld [vmem:[#allocation5 + $0x58] sm:$0xff]
    %v52 = vld [vmem:[#allocation5 + $0x60] sm:$0xff]
    %v53 = vld [vmem:[#allocation5 + $0x68] sm:$0xff]
    %v54 = vld [vmem:[#allocation5 + $0x70] sm:$0xff]
    %v55 = vld [vmem:[#allocation5 + $0x78] sm:$0xff]
    %v56 = vld [vmem:[#allocation5 + $0x80] sm:$0xff]
    %v57 = vld [vmem:[#allocation5 + $0x88] sm:$0xff]
    %v58 = vld [vmem:[#allocation5 + $0x90] sm:$0xff]
    %v59 = vld [vmem:[#allocation5 + $0x98] sm:$0xff]
    %v60 = vld [vmem:[#allocation5 + $0xa0] sm:$0xff]
    %v61 = vld [vmem:[#allocation5 + $0xa8] sm:$0xff]
    %v62 = vld [vmem:[#allocation5 + $0xb0] sm:$0xff]
    %v63 = vld [vmem:[#allocation5 + $0xb8] sm:$0xff]
    %v64 = vld [vmem:[#allocation5 + $0xc0] sm:$0xff]
    %v65 = vld [vmem:[#allocation5 + $0xc8] sm:$0xff]
    %v66 = vld [vmem:[#allocation5 + $0xd0] sm:$0xff]
    %v67 = vld [vmem:[#allocation5 + $0xd8] sm:$0xff]
    %v68 = vld [vmem:[#allocation5 + $0xe0] sm:$0xff]
    %v69 = vld [vmem:[#allocation5 + $0xe8] sm:$0xff]
    %v70 = vld [vmem:[#allocation5 + $0xf0] sm:$0xff]
    %v71 = vld [vmem:[#allocation5 + $0xf8] sm:$0xff]
    %v72 = vld [vmem:[#allocation5 + $0x100] sm:$0xff]
    %v73 = vld [vmem:[#allocation5 + $0x108] sm:$0xff]
    %v74 = vld [vmem:[#allocation5 + $0x110] sm:$0xff]
    %v75 = vld [vmem:[#allocation5 + $0x118] sm:$0xff]
    %v76 = vld [vmem:[#allocation5 + $0x120] sm:$0xff]
    %v77 = vld [vmem:[#allocation5 + $0x128] sm:$0xff]
    %v78 = vld [vmem:[#allocation5 + $0x130] sm:$0xff]
    %v79 = vld [vmem:[#allocation5 + $0x138] sm:$0xff]
    %v80 = vld [vmem:[#allocation5 + $0x140] sm:$0xff]
    %v81 = vld [vmem:[#allocation5 + $0x148] sm:$0xff]
    %v82 = vld [vmem:[#allocation5 + $0x150] sm:$0xff]
    %v83 = vld [vmem:[#allocation5 + $0x158] sm:$0xff]
    %v84 = vld [vmem:[#allocation5 + $0x160] sm:$0xff]
    %v85 = vld [vmem:[#allocation5 + $0x168] sm:$0xff]
    %v86 = vld [vmem:[#allocation5 + $0x170] sm:$0xff]
    %v87 = vld [vmem:[#allocation5 + $0x178] sm:$0xff]
    %v88 = vld [vmem:[#allocation5 + $0x180] sm:$0xff]
    %v89 = vld [vmem:[#allocation5 + $0x188] sm:$0xff]
    %v90 = vld [vmem:[#allocation5 + $0x190] sm:$0xff]
    %v91 = vld [vmem:[#allocation5 + $0x198] sm:$0xff]
    %v92 = vld [vmem:[#allocation5 + $0x1a0] sm:$0xff]
    %v93 = vld [vmem:[#allocation5 + $0x1a8] sm:$0xff]
    %v94 = vld [vmem:[#allocation5 + $0x1b0] sm:$0xff]
    %v95 = vld [vmem:[#allocation5 + $0x1b8] sm:$0xff]
    %v96 = vld [vmem:[#allocation5 + $0x1c0] sm:$0xff]
    %v97 = vld [vmem:[#allocation5 + $0x1c8] sm:$0xff]
    %v98 = vld [vmem:[#allocation5 + $0x1d0] sm:$0xff]
    %v99 = vld [vmem:[#allocation5 + $0x1d8] sm:$0xff]
    %v100 = vld [vmem:[#allocation5 + $0x1e0] sm:$0xff]
    %v101 = vld [vmem:[#allocation5 + $0x1e8] sm:$0xff]
    %v102 = vld [vmem:[#allocation5 + $0x1f0] sm:$0xff]
    %v103 = vld [vmem:[#allocation5 + $0x1f8] sm:$0xff]
    %v104 = vld [vmem:[#allocation5 + $0x200] sm:$0xff]
    %v105 = vld [vmem:[#allocation5 + $0x208] sm:$0xff]
    %v106 = vld [vmem:[#allocation5 + $0x210] sm:$0xff]
    %v107 = vld [vmem:[#allocation5 + $0x218] sm:$0xff]
    %v108 = vld [vmem:[#allocation5 + $0x220] sm:$0xff]
    %v109 = vld [vmem:[#allocation5 + $0x228] sm:$0xff]
    %v110 = vld [vmem:[#allocation5 + $0x230] sm:$0xff]
    %v111 = vld [vmem:[#allocation5 + $0x238] sm:$0xff]
    %v112 = vld [vmem:[#allocation5 + $0x240] sm:$0xff]
    %v113 = vld [vmem:[#allocation5 + $0x248] sm:$0xff]
    %v114 = vld [vmem:[#allocation5 + $0x250] sm:$0xff]
    %v115 = vld [vmem:[#allocation5 + $0x258] sm:$0xff]
    %v116 = vld [vmem:[#allocation5 + $0x260] sm:$0xff]
    %v117 = vld [vmem:[#allocation5 + $0x268] sm:$0xff]
    %v118 = vld [vmem:[#allocation5 + $0x270] sm:$0xff]
    %v119 = vld [vmem:[#allocation5 + $0x278] sm:$0xff]
    %v120 = vld [vmem:[#allocation5 + $0x280] sm:$0xff]
    %v121 = vld [vmem:[#allocation5 + $0x288] sm:$0xff]
    %v122 = vld [vmem:[#allocation5 + $0x290] sm:$0xff]
    %v123 = vld [vmem:[#allocation5 + $0x298] sm:$0xff]
    %v124 = vld [vmem:[#allocation5 + $0x2a0] sm:$0xff]
    %v125 = vld [vmem:[#allocation5 + $0x2a8] sm:$0xff]
    %v126 = vld [vmem:[#allocation5 + $0x2b0] sm:$0xff]
    %v127 = vld [vmem:[#allocation5 + $0x2b8] sm:$0xff]
    %v128 = vld [vmem:[#allocation5 + $0x2c0] sm:$0xff]
    %v129 = vld [vmem:[#allocation5 + $0x2c8] sm:$0xff]
    %v130 = vld [vmem:[#allocation5 + $0x2d0] sm:$0xff]
    %v131 = vld [vmem:[#allocation5 + $0x2d8] sm:$0xff]
    %v132 = vld [vmem:[#allocation5 + $0x2e0] sm:$0xff]
    %v133 = vld [vmem:[#allocation5 + $0x2e8] sm:$0xff]
    %v134 = vld [vmem:[#allocation5 + $0x2f0] sm:$0xff]
    %v135 = vld [vmem:[#allocation5 + $0x2f8] sm:$0xff]
    %v136 = vld [vmem:[#allocation5 + $0x300] sm:$0xff]
    %v137 = vld [vmem:[#allocation5 + $0x308] sm:$0xff]
    %v138 = vld [vmem:[#allocation5 + $0x310] sm:$0xff]
    %v139 = vld [vmem:[#allocation5 + $0x318] sm:$0xff]
    %v140 = vld [vmem:[#allocation5 + $0x320] sm:$0xff]
    %v141 = vld [vmem:[#allocation5 + $0x328] sm:$0xff]
    %v142 = vld [vmem:[#allocation5 + $0x330] sm:$0xff]
    %v143 = vld [vmem:[#allocation5 + $0x338] sm:$0xff]
    %v144 = vld [vmem:[#allocation5 + $0x340] sm:$0xff]
    %v145 = vld [vmem:[#allocation5 + $0x348] sm:$0xff]
    %v146 = vld [vmem:[#allocation5 + $0x350] sm:$0xff]
    %v147 = vld [vmem:[#allocation5 + $0x358] sm:$0xff]
    %v148 = vld [vmem:[#allocation5 + $0x360] sm:$0xff]
    %v149 = vld [vmem:[#allocation5 + $0x368] sm:$0xff]
    %v150 = vld [vmem:[#allocation5 + $0x370] sm:$0xff]
    %v151 = vld [vmem:[#allocation5 + $0x378] sm:$0xff]
    %v152 = vld [vmem:[#allocation5 + $0x380] sm:$0xff]
    %v153 = vld [vmem:[#allocation5 + $0x388] sm:$0xff]
    %v154 = vld [vmem:[#allocation5 + $0x390] sm:$0xff]
    %v155 = vld [vmem:[#allocation5 + $0x398] sm:$0xff]
    %v156 = vld [vmem:[#allocation5 + $0x3a0] sm:$0xff]
    %v157 = vld [vmem:[#allocation5 + $0x3a8] sm:$0xff]
    %v158 = vld [vmem:[#allocation5 + $0x3b0] sm:$0xff]
    %v159 = vld [vmem:[#allocation5 + $0x3b8] sm:$0xff]
    %v160 = vld [vmem:[#allocation5 + $0x3c0] sm:$0xff]
    %v161 = vld [vmem:[#allocation5 + $0x3c8] sm:$0xff]
    %v162 = vld [vmem:[#allocation5 + $0x3d0] sm:$0xff]
    %v163 = vld [vmem:[#allocation5 + $0x3d8] sm:$0xff]
    %v164 = vld [vmem:[#allocation5 + $0x3e0] sm:$0xff]
    %v165 = vld [vmem:[#allocation5 + $0x3e8] sm:$0xff]
    %v166 = vld [vmem:[#allocation5 + $0x3f0] sm:$0xff]
    %v167 = vld [vmem:[#allocation5 + $0x3f8] sm:$0xff]
    %v168 = vld [vmem:[#allocation5 + $0x400] sm:$0xff]
    %v169 = vld [vmem:[#allocation5 + $0x408] sm:$0xff]
    %v170 = vld [vmem:[#allocation5 + $0x410] sm:$0xff]
    %v171 = vld [vmem:[#allocation5 + $0x418] sm:$0xff]
    %v172 = vld [vmem:[#allocation5 + $0x420] sm:$0xff]
    %v173 = vld [vmem:[#allocation5 + $0x428] sm:$0xff]
    %v174 = vld [vmem:[#allocation5 + $0x430] sm:$0xff]
    %v175 = vld [vmem:[#allocation5 + $0x438] sm:$0xff]
    %v176 = vld [vmem:[#allocation5 + $0x440] sm:$0xff]
    %v177 = vld [vmem:[#allocation5 + $0x448] sm:$0xff]
    %v178 = vld [vmem:[#allocation5 + $0x450] sm:$0xff]
    %v179 = vld [vmem:[#allocation5 + $0x458] sm:$0xff]
    %v180 = vld [vmem:[#allocation5 + $0x460] sm:$0xff]
    %v181 = vld [vmem:[#allocation5 + $0x468] sm:$0xff]
    %v182 = vld [vmem:[#allocation5 + $0x470] sm:$0xff]
    %v183 = vld [vmem:[#allocation5 + $0x478] sm:$0xff]
    %v184 = vld [vmem:[#allocation5 + $0x480] sm:$0xff]
    %v185 = vld [vmem:[#allocation5 + $0x488] sm:$0xff]
    %v186 = vld [vmem:[#allocation5 + $0x490] sm:$0xff]
    %v187 = vld [vmem:[#allocation5 + $0x498] sm:$0xff]
    %v188 = vld [vmem:[#allocation5 + $0x4a0] sm:$0xff]
    %v189 = vld [vmem:[#allocation5 + $0x4a8] sm:$0xff]
    %v190 = vld [vmem:[#allocation5 + $0x4b0] sm:$0xff]
    %v191 = vld [vmem:[#allocation5 + $0x4b8] sm:$0xff]
    %v192 = vld [vmem:[#allocation5 + $0x4c0] sm:$0xff]
    %v193 = vld [vmem:[#allocation5 + $0x4c8] sm:$0xff]
    %v194 = vld [vmem:[#allocation5 + $0x4d0] sm:$0xff]
    %v195 = vld [vmem:[#allocation5 + $0x4d8] sm:$0xff]
    %v196 = vld [vmem:[#allocation5 + $0x4e0] sm:$0xff]
    %v197 = vld [vmem:[#allocation5 + $0x4e8] sm:$0xff]
    %v198 = vld [vmem:[#allocation5 + $0x4f0] sm:$0xff]
    %v199 = vld [vmem:[#allocation5 + $0x4f8] sm:$0xff]
    %200 = vmatprep.subr.mxu0 %v41
    %201 = vmatpush1.msra.mxu0 %v40
    %202 = vmatprep.subr.mxu0 %v46
    %203 = vmatpush1.msra.mxu0 %v45
    %204 = vmatprep.subr.mxu0 %v51
    %205 = vmatpush1.msra.mxu0 %v50
    %206 = vmatprep.subr.mxu0 %v56
    %207 = vmatpush1.msra.mxu0 %v55
    %208 = vmatprep.subr.mxu0 %v61
    %209 = vmatpush1.msra.mxu0 %v60
    %210 = vmatprep.subr.mxu0 %v66
    %211 = vmatpush1.msra.mxu0 %v65
    %212 = vmatprep.subr.mxu0 %v71
    %213 = vmatpush1.msra.mxu0 %v70
    %214 = vmatprep.subr.mxu0 %v76
    %215 = vmatpush1.msra.mxu0 %v75
    %216 = vmatprep.subr.mxu0 %v81
    %217 = vmatpush1.msra.mxu0 %v80
    %218 = vmatprep.subr.mxu0 %v86
    %219 = vmatpush1.msra.mxu0 %v85
    %220 = vmatprep.subr.mxu0 %v91
    %221 = vmatpush1.msra.mxu0 %v90
    %222 = vmatprep.subr.mxu0 %v96
    %223 = vmatpush1.msra.mxu0 %v95
    %224 = vmatprep.subr.mxu0 %v101
    %225 = vmatpush1.msra.mxu0 %v100
    %226 = vmatprep.subr.mxu0 %v106
    %227 = vmatpush1.msra.mxu0 %v105
    %228 = vmatprep.subr.mxu0 %v111
    %229 = vmatpush1.msra.mxu0 %v110
    %230 = vmatprep.subr.mxu0 %v116
    %231 = vmatpush1.msra.mxu0 %v115
    %232 = vmatprep.subr.mxu0 %v121
    %233 = vmatpush1.msra.mxu0 %v120
    %234 = vmatprep.subr.mxu0 %v126
    %235 = vmatpush1.msra.mxu0 %v125
    %236 = vmatprep.subr.mxu0 %v131
    %237 = vmatpush1.msra.mxu0 %v130
    %238 = vmatprep.subr.mxu0 %v136
    %239 = vmatpush1.msra.mxu0 %v135
    %240 = vmatprep.subr.mxu0 %v141
    %241 = vmatpush1.msra.mxu0 %v140
    %242 = vmatprep.subr.mxu0 %v146
    %243 = vmatpush1.msra.mxu0 %v145
    %244 = vmatprep.subr.mxu0 %v151
    %245 = vmatpush1.msra.mxu0 %v150
    %246 = vmatprep.subr.mxu0 %v156
    %247 = vmatpush1.msra.mxu0 %v155
    %248 = vmatprep.subr.mxu0 %v161
    %249 = vmatpush1.msra.mxu0 %v160
    %250 = vmatprep.subr.mxu0 %v166
    %251 = vmatpush1.msra.mxu0 %v165
    %252 = vmatprep.subr.mxu0 %v171
    %253 = vmatpush1.msra.mxu0 %v170
    %254 = vmatprep.subr.mxu0 %v176
    %255 = vmatpush1.msra.mxu0 %v175
    %256 = vmatprep.subr.mxu0 %v181
    %257 = vmatpush1.msra.mxu0 %v180
    %258 = vmatprep.subr.mxu0 %v186
    %259 = vmatpush1.msra.mxu0 %v185
    %260 = vmatprep.subr.mxu0 %v191
    %261 = vmatpush1.msra.mxu0 %v190
    %262 = vmatprep.subr.mxu0 %v196
    %263 = vmatpush1.msra.mxu0 %v195
    %264 = vmatprep.mubr.f32.mxu0 %v39
    %265 = vmatmul.mubr.f32.gmra.mrb[0].mxu0 %v38
    %v266 = vpop.f32.mrb[0].mxu0
    %v267 = vadd.f32 0.0, %v266
    %v268 = vpop.f32.mrb[0].mxu0
    %v269 = vadd.f32 0.0, %v268
    %270 = vdwg.mxu0
    %271 = vmatprep.subr.mxu0 %v43
    %272 = vmatpush1.msra.mxu0 %v42
    %273 = vmatprep.subr.mxu0 %v48
    %274 = vmatpush1.msra.mxu0 %v47
    %275 = vmatprep.subr.mxu0 %v53
    %276 = vmatpush1.msra.mxu0 %v52
    %277 = vmatprep.subr.mxu0 %v58
    %278 = vmatpush1.msra.mxu0 %v57
    %279 = vmatprep.subr.mxu0 %v63
    %280 = vmatpush1.msra.mxu0 %v62
    %281 = vmatprep.subr.mxu0 %v68
    %282 = vmatpush1.msra.mxu0 %v67
    %283 = vmatprep.subr.mxu0 %v73
    %284 = vmatpush1.msra.mxu0 %v72
    %285 = vmatprep.subr.mxu0 %v78
    %286 = vmatpush1.msra.mxu0 %v77
    %287 = vmatprep.subr.mxu0 %v83
    %288 = vmatpush1.msra.mxu0 %v82
    %289 = vmatprep.subr.mxu0 %v88
    %290 = vmatpush1.msra.mxu0 %v87
    %291 = vmatprep.subr.mxu0 %v93
    %292 = vmatpush1.msra.mxu0 %v92
    %293 = vmatprep.subr.mxu0 %v98
    %294 = vmatpush1.msra.mxu0 %v97
    %295 = vmatprep.subr.mxu0 %v103
    %296 = vmatpush1.msra.mxu0 %v102
    %297 = vmatprep.subr.mxu0 %v108
    %298 = vmatpush1.msra.mxu0 %v107
    %299 = vmatprep.subr.mxu0 %v113
    %300 = vmatpush1.msra.mxu0 %v112
    %301 = vmatprep.subr.mxu0 %v118
    %302 = vmatpush1.msra.mxu0 %v117
    %303 = vmatprep.subr.mxu0 %v123
    %304 = vmatpush1.msra.mxu0 %v122
    %305 = vmatprep.subr.mxu0 %v128
    %306 = vmatpush1.msra.mxu0 %v127
    %307 = vmatprep.subr.mxu0 %v133
    %308 = vmatpush1.msra.mxu0 %v132
    %309 = vmatprep.subr.mxu0 %v138
    %310 = vmatpush1.msra.mxu0 %v137
    %311 = vmatprep.subr.mxu0 %v143
    %312 = vmatpush1.msra.mxu0 %v142
    %313 = vmatprep.subr.mxu0 %v148
    %314 = vmatpush1.msra.mxu0 %v147
    %315 = vmatprep.subr.mxu0 %v153
    %316 = vmatpush1.msra.mxu0 %v152
    %317 = vmatprep.subr.mxu0 %v158
    %318 = vmatpush1.msra.mxu0 %v157
    %319 = vmatprep.subr.mxu0 %v163
    %320 = vmatpush1.msra.mxu0 %v162
    %321 = vmatprep.subr.mxu0 %v168
    %322 = vmatpush1.msra.mxu0 %v167
    %323 = vmatprep.subr.mxu0 %v173
    %324 = vmatpush1.msra.mxu0 %v172
    %325 = vmatprep.subr.mxu0 %v178
    %326 = vmatpush1.msra.mxu0 %v177
    %327 = vmatprep.subr.mxu0 %v183
    %328 = vmatpush1.msra.mxu0 %v182
    %329 = vmatprep.subr.mxu0 %v188
    %330 = vmatpush1.msra.mxu0 %v187
    %331 = vmatprep.subr.mxu0 %v193
    %332 = vmatpush1.msra.mxu0 %v192
    %333 = vmatprep.subr.mxu0 %v198
    %334 = vmatpush1.msra.mxu0 %v197
    %335 = vmatprep.mubr.f32.mxu0 %v39
    %336 = vmatmul.mubr.f32.gmra.mrb[0].mxu0 %v38
    %v337 = vpop.f32.mrb[0].mxu0
    %v338 = vadd.f32 0.0, %v337
    %v339 = vpop.f32.mrb[0].mxu0
    %v340 = vadd.f32 0.0, %v339
    %341 = vdwg.mxu0
    %342 = vmatprep.subr.mxu0 0.0
    %343 = vmatpush1.msra.mxu0 %v44
    %344 = vmatprep.subr.mxu0 0.0
    %345 = vmatpush1.msra.mxu0 %v49
    %346 = vmatprep.subr.mxu0 0.0
    %347 = vmatpush1.msra.mxu0 %v54
    %348 = vmatprep.subr.mxu0 0.0
    %349 = vmatpush1.msra.mxu0 %v59
    %350 = vmatprep.subr.mxu0 0.0
    %351 = vmatpush1.msra.mxu0 %v64
    %352 = vmatprep.subr.mxu0 0.0
    %353 = vmatpush1.msra.mxu0 %v69
    %354 = vmatprep.subr.mxu0 0.0
    %355 = vmatpush1.msra.mxu0 %v74
    %356 = vmatprep.subr.mxu0 0.0
    %357 = vmatpush1.msra.mxu0 %v79
    %358 = vmatprep.subr.mxu0 0.0
    %359 = vmatpush1.msra.mxu0 %v84
    %360 = vmatprep.subr.mxu0 0.0
    %361 = vmatpush1.msra.mxu0 %v89
    %362 = vmatprep.subr.mxu0 0.0
    %363 = vmatpush1.msra.mxu0 %v94
    %364 = vmatprep.subr.mxu0 0.0
    %365 = vmatpush1.msra.mxu0 %v99
    %366 = vmatprep.subr.mxu0 0.0
    %367 = vmatpush1.msra.mxu0 %v104
    %368 = vmatprep.subr.mxu0 0.0
    %369 = vmatpush1.msra.mxu0 %v109
    %370 = vmatprep.subr.mxu0 0.0
    %371 = vmatpush1.msra.mxu0 %v114
    %372 = vmatprep.subr.mxu0 0.0
    %373 = vmatpush1.msra.mxu0 %v119
    %374 = vmatprep.subr.mxu0 0.0
    %375 = vmatpush1.msra.mxu0 %v124
    %376 = vmatprep.subr.mxu0 0.0
    %377 = vmatpush1.msra.mxu0 %v129
    %378 = vmatprep.subr.mxu0 0.0
    %379 = vmatpush1.msra.mxu0 %v134
    %380 = vmatprep.subr.mxu0 0.0
    %381 = vmatpush1.msra.mxu0 %v139
    %382 = vmatprep.subr.mxu0 0.0
    %383 = vmatpush1.msra.mxu0 %v144
    %384 = vmatprep.subr.mxu0 0.0
    %385 = vmatpush1.msra.mxu0 %v149
    %386 = vmatprep.subr.mxu0 0.0
    %387 = vmatpush1.msra.mxu0 %v154
    %388 = vmatprep.subr.mxu0 0.0
    %389 = vmatpush1.msra.mxu0 %v159
    %390 = vmatprep.subr.mxu0 0.0
    %391 = vmatpush1.msra.mxu0 %v164
    %392 = vmatprep.subr.mxu0 0.0
    %393 = vmatpush1.msra.mxu0 %v169
    %394 = vmatprep.subr.mxu0 0.0
    %395 = vmatpush1.msra.mxu0 %v174
    %396 = vmatprep.subr.mxu0 0.0
    %397 = vmatpush1.msra.mxu0 %v179
    %398 = vmatprep.subr.mxu0 0.0
    %399 = vmatpush1.msra.mxu0 %v184
    %400 = vmatprep.subr.mxu0 0.0
    %401 = vmatpush1.msra.mxu0 %v189
    %402 = vmatprep.subr.mxu0 0.0
    %403 = vmatpush1.msra.mxu0 %v194
    %404 = vmatprep.subr.mxu0 0.0
    %405 = vmatpush1.msra.mxu0 %v199
    %406 = vmatprep.mubr.f32.mxu0 %v39
    %407 = vmatmul.mubr.f32.gmra.mrb[0].mxu0 %v38
    %v408 = vpop.f32.mrb[0].mxu0
    %v409 = vadd.f32 0.0, %v408
    %v410 = vpop.f32.mrb[0].mxu0
    %411 = vdwg.mxu0
    %412 = vst [vmem:[#allocation7] sm:$0xff] %v267
    %413 = vst [vmem:[#allocation7 + $0x8] sm:$0xff] %v269
    %414 = vst [vmem:[#allocation7 + $0x10] sm:$0xff] %v338
    %415 = vst [vmem:[#allocation7 + $0x18] sm:$0xff] %v340
    %416 = vst [vmem:[#allocation7 + $0x20] sm:$0xff] %v409
    // Predicated region
    $region18: #{tpu_custom_call.1} parent=1 // pred_check
      _
    $region19: #{tpu_custom_call.1} parent=1 // pred_check_branch
      %418 = sbr.rel (0) target = $region21
    $region20: #{tpu_custom_call.1} parent=1 // pred_region
      %s420 = ssub.s32 640, 640
      %421 = vsyncadd [#allocation4], %s420
      %s423 = sshll.u32 [#allocation7], 4
      %s424 = int_to_ptr.vmem [resolvable:$true] %s423
      %426 = dma.vmem_to_hbm [thread:$0]  %s424, 640, %s2, [#allocation4]
    $region21: #{tpu_custom_call.1} parent=1 // pred_fallthru
      _
    // Predicated region
    $region22: #{tpu_custom_call.1} parent=1 // pred_check
      _
    $region23: #{tpu_custom_call.1} parent=1 // pred_check_branch
      %428 = sbr.rel (0) target = $region25
    $region24: #{tpu_custom_call.1} parent=1 // pred_region
      %429 = dma.done [#allocation4], 640
    $region25: #{tpu_custom_call.1} parent=1 // pred_fallthru
      _
    %430 = vsyncpa [#allocation3], 1
    %431 = vsyncpa [#allocation6], 1
    %432 = vsyncpa [#allocation4], 1

</llo_original>
